<compile_context>
chip_gen: v6e
topology: v6e:2x2x1
jax: 0.10.0
libtpu: 0.0.40
codegen_flags: <defaults>
</compile_context>

<pallas_src>
import functools

import jax
import jax.numpy as jnp
from jax.experimental import pallas as pl
from jax.experimental.pallas import tpu as pltpu


def _sdpa_kernel(*refs, inv_temp, has_kmask, has_qmask, return_attn):
    """One (bh, q-tile) grid step.

    Ref layout (mask / attn refs presence is static, baked via partial):
      q_ref   : (1, tq, Dk)   compute dtype (bf16)
      kt_ref  : (1, Dk, Lk)   compute dtype, K pre-transposed, VMEM-resident/head
      v_ref   : (1, Lk, Dv)   compute dtype, VMEM-resident per head
      km_ref  : (1, 1, Lk) or (1, tq, Lk)  int    (only if has_kmask)
      qm_ref  : (1, tq, 1) or (1, tq, Lk)  int    (only if has_qmask)
      o_ref   : (1, tq, Dv)
      attn_ref: (1, tq, Lk)                       (only if return_attn)
    """
    it = iter(refs)
    q_ref, kt_ref, v_ref = next(it), next(it), next(it)
    km_ref = next(it) if has_kmask else None
    qm_ref = next(it) if has_qmask else None
    o_ref = next(it)
    attn_ref = next(it) if return_attn else None

    q = q_ref[0]                                   # (tq, Dk)
    kt = kt_ref[0]                                 # (Dk, Lk)
    v = v_ref[0]                                   # (Lk, Dv)

    # scores = q @ k^T : f32 accumulation on the MXU; scale afterwards in f32.
    s = jnp.dot(q, kt, preferred_element_type=jnp.float32) * inv_temp
    if has_kmask:
        # Broadcast of the compact (1,Lk) / (tq,1)-style mask happens here.
        s = jnp.where(km_ref[0] != 0, jnp.float32(-10000.0), s)

    # Numerically-stable softmax over keys; the divide goes to the EUP.
    m = jnp.max(s, axis=-1, keepdims=True)
    e = jnp.exp(s - m)
    l = jnp.sum(e, axis=-1, keepdims=True)
    p = e * pl.reciprocal(l, approx=True)          # (tq, Lk) f32

    # TODO(synk): attention dropout omitted (eval-mode identity); training parity
    # would need pltpu.prng_seed / pltpu.prng_random_bits driven masking of p.

    out = jnp.dot(p.astype(v.dtype), v, preferred_element_type=jnp.float32)
    o_ref[0] = out.astype(o_ref.dtype)

    if return_attn:
        if has_qmask:
            # qmask only affects the returned attention map (matches PyTorch).
            p = jnp.where(qm_ref[0] != 0, jnp.float32(0.0), p)
        attn_ref[0] = p.astype(attn_ref.dtype)


def _expand_to_4d(mask):
    m = jnp.asarray(mask)
    if m.ndim > 4:
        raise ValueError("mask rank must be <= 4")
    return m.reshape((1,) * (4 - m.ndim) + m.shape)


def scaled_dot_product_attention(q, k, v, temperature, kmask=None, qmask=None,
                                 *, q_tile=128, compute_dtype=jnp.bfloat16,
                                 attn_dtype=jnp.bfloat16, return_attn=True):
    """q: (B,H,Lq,Dk), k: (B,H,Lk,Dk), v: (B,H,Lk,Dv).

    Returns (output (B,H,Lq,Dv) in q.dtype, attn (B,H,Lq,Lk) in attn_dtype).
    kmask / qmask are optional boolean arrays broadcastable to (B,H,Lq,Lk).
    With return_attn=False only the output is produced (no attn HBM writeback)
    and (out, None) is returned.
    """
    B, H, Lq, Dk = q.shape
    _, _, Lk, Dv = v.shape
    BH = B * H

    tq = min(q_tile, Lq)
    # TODO(synk): pad/mask the tail q tile for Lq not divisible by q_tile.
    assert Lq % tq == 0, "Lq must be divisible by the query tile"
    grid = (BH, Lq // tq)

    cd = jnp.dtype(compute_dtype)
    out_dtype = q.dtype
    attn_dtype = jnp.dtype(attn_dtype)
    inv_temp = float(1.0 / temperature)

    # bf16 MXU inputs; K pre-transposed so QK^T needs no in-kernel transpose.
    q3 = q.reshape(BH, Lq, Dk).astype(cd)
    kt3 = jnp.swapaxes(k.reshape(BH, Lk, Dk), 1, 2).astype(cd)    # (BH, Dk, Lk)
    v3 = v.reshape(BH, Lk, Dv).astype(cd)

    in_specs = [
        pl.BlockSpec((1, tq, Dk), lambda bh, i: (bh, i, 0)),      # q tile
        pl.BlockSpec((1, Dk, Lk), lambda bh, i: (bh, 0, 0)),      # K^T, resident/head
        pl.BlockSpec((1, Lk, Dv), lambda bh, i: (bh, 0, 0)),      # V,   resident/head
    ]
    args = [q3, kt3, v3]
    mask_block_bytes = 0

    has_kmask = kmask is not None
    if has_kmask:
        km4 = _expand_to_4d(kmask)
        if km4.shape[2] == 1:
            # Compact per-key mask: (BH, 1, Lk), fetched once per (b, h).
            km = jnp.broadcast_to(km4, (B, H, 1, Lk)).reshape(BH, 1, Lk).astype(jnp.int32)
            in_specs.append(pl.BlockSpec((1, 1, Lk), lambda bh, i: (bh, 0, 0)))
            mask_block_bytes += 2 * Lk * 4
        else:
            # Query-dependent key mask: int8 full tiles (fallback path).
            km = jnp.broadcast_to(km4, (B, H, Lq, Lk)).reshape(BH, Lq, Lk).astype(jnp.int8)
            in_specs.append(pl.BlockSpec((1, tq, Lk), lambda bh, i: (bh, i, 0)))
            mask_block_bytes += 2 * tq * Lk
        args.append(km)

    has_qmask = (qmask is not None) and return_attn   # qmask only touches attn
    if has_qmask:
        qm4 = _expand_to_4d(qmask)
        if qm4.shape[3] == 1:
            # Compact per-query mask column: (BH, Lq, 1).
            qm = jnp.broadcast_to(qm4, (B, H, Lq, 1)).reshape(BH, Lq, 1).astype(jnp.int32)
            in_specs.append(pl.BlockSpec((1, tq, 1), lambda bh, i: (bh, i, 0)))
            mask_block_bytes += 2 * tq * 4
        else:
            qm = jnp.broadcast_to(qm4, (B, H, Lq, Lk)).reshape(BH, Lq, Lk).astype(jnp.int8)
            in_specs.append(pl.BlockSpec((1, tq, Lk), lambda bh, i: (bh, i, 0)))
            mask_block_bytes += 2 * tq * Lk
        args.append(qm)

    out_specs = [pl.BlockSpec((1, tq, Dv), lambda bh, i: (bh, i, 0))]
    out_shape = [jax.ShapeDtypeStruct((BH, Lq, Dv), out_dtype)]
    if return_attn:
        out_specs.append(pl.BlockSpec((1, tq, Lk), lambda bh, i: (bh, i, 0)))
        out_shape.append(jax.ShapeDtypeStruct((BH, Lq, Lk), attn_dtype))

    # Explicit VMEM budget (double-buffered blocks + f32 softmax intermediates),
    # clamped to 64 MiB so the same code is safe on v7x's smaller VMEM.
    # TODO(synk): for very long Lk with return_attn=False, add a flash-style
    # key-axis tiling (online softmax) so the (tq, Lk) f32 slabs stay bounded.
    est = (2 * tq * Dk * cd.itemsize
           + 2 * Dk * Lk * cd.itemsize
           + 2 * Lk * Dv * cd.itemsize
           + 2 * tq * Dv * jnp.dtype(out_dtype).itemsize
           + (2 * tq * Lk * attn_dtype.itemsize if return_attn else 0)
           + mask_block_bytes
           + 6 * tq * Lk * 4
           + (2 << 20))
    vmem_limit = int(min(64 << 20, max(est, 16 << 20)))

    kernel = functools.partial(_sdpa_kernel, inv_temp=inv_temp,
                               has_kmask=has_kmask, has_qmask=has_qmask,
                               return_attn=return_attn)

    results = pl.pallas_call(
        kernel,
        out_shape=tuple(out_shape),
        grid_spec=pltpu.PrefetchScalarGridSpec(
            num_scalar_prefetch=0,
            grid=grid,
            in_specs=in_specs,
            out_specs=out_specs,
        ),
        compiler_params=pltpu.CompilerParams(
            dimension_semantics=("parallel", "arbitrary"),
            vmem_limit_bytes=vmem_limit),
    )(*args)

    out = results[0].reshape(B, H, Lq, Dv)
    if not return_attn:
        return out, None
    attn = results[1].reshape(B, H, Lq, Lk)
    return out, attn


def reference_sdpa(q, k, v, temperature, kmask=None, qmask=None):
    qf, kf, vf = (x.astype(jnp.float32) for x in (q, k, v))
    attn = jnp.einsum('bhqd,bhkd->bhqk', qf / temperature, kf)
    if kmask is not None:
        attn = jnp.where(kmask, -10000.0, attn)
    attn = jax.nn.softmax(attn, axis=-1)
    out = jnp.einsum('bhqk,bhkd->bhqd', attn, vf)
    if qmask is not None:
        attn = jnp.where(qmask, 0.0, attn)
    return out, attn


if __name__ == "__main__":
    # Lane-dense small shapes: head_dim and key length are multiples of 128.
    B, H, Lq, Lk, Dk, Dv = 2, 2, 128, 128, 128, 128
    temperature = float(Dk) ** 0.5

    key = jax.random.PRNGKey(0)
    k_q, k_k, k_v, k_km, k_qm, k_kmf = jax.random.split(key, 6)

    q = jax.random.normal(k_q, (B, H, Lq, Dk), dtype=jnp.float32)
    k = jax.random.normal(k_k, (B, H, Lk, Dk), dtype=jnp.float32)
    v = jax.random.normal(k_v, (B, H, Lk, Dv), dtype=jnp.float32)

    # Typical broadcastable masks (True = masked out).
    kmask = jax.random.bernoulli(k_km, 0.15, (B, 1, 1, Lk))
    qmask = jax.random.bernoulli(k_qm, 0.15, (B, 1, Lq, 1))

    # bf16 MXU inputs + bf16 attn storage -> compare against the f32 reference
    # at bf16-level tolerances.
    def check(out, attn, ref_out, ref_attn, tag):
        assert jnp.allclose(out.astype(jnp.float32), ref_out,
                            atol=2e-2, rtol=2e-2), f"output mismatch ({tag})"
        if attn is not None:
            assert jnp.allclose(attn.astype(jnp.float32), ref_attn,
                                atol=2e-2, rtol=2e-2), f"attn mismatch ({tag})"

    # 1) Both masks in their compact forms (per-key kmask, per-query qmask).
    out, attn = scaled_dot_product_attention(q, k, v, temperature,
                                             kmask=kmask, qmask=qmask)
    out = jax.block_until_ready(out)
    attn = jax.block_until_ready(attn)
    ro, ra = reference_sdpa(q, k, v, temperature, kmask=kmask, qmask=qmask)
    assert out.shape == (B, H, Lq, Dv) and attn.shape == (B, H, Lq, Lk)
    check(out, attn, ro, ra, "masked")

    # 2) No masks.
    out2, attn2 = scaled_dot_product_attention(q, k, v, temperature)
    out2 = jax.block_until_ready(out2)
    ro2, ra2 = reference_sdpa(q, k, v, temperature)
    check(out2, attn2, ro2, ra2, "no-mask")

    # 3) kmask only, attention map not needed (fast path: no attn writeback).
    out3, attn3 = scaled_dot_product_attention(q, k, v, temperature,
                                               kmask=kmask, return_attn=False)
    out3 = jax.block_until_ready(out3)
    ro3, _ = reference_sdpa(q, k, v, temperature, kmask=kmask)
    assert attn3 is None
    check(out3, None, ro3, None, "no-attn")

    # 4) Query-dependent key mask -> exercises the full-tile int8 fallback.
    kmask_full = jax.random.bernoulli(k_kmf, 0.1, (B, 1, Lq, Lk))
    out4, attn4 = scaled_dot_product_attention(q, k, v, temperature,
                                               kmask=kmask_full)
    out4 = jax.block_until_ready(out4)
    ro4, ra4 = reference_sdpa(q, k, v, temperature, kmask=kmask_full)
    check(out4, attn4, ro4, ra4, "full-kmask")

    print("KERNEL_OK")
</pallas_src>

<mosaic_0001>
module attributes {stable_mosaic.version = 11 : i64} {
  func.func @_sdpa_kernel(%arg0: i32, %arg1: i32, %arg2: memref<1x128x128xbf16, #tpu.memory_space<vmem>>, %arg3: memref<1x128x128xbf16, #tpu.memory_space<vmem>>, %arg4: memref<1x128x128xbf16, #tpu.memory_space<vmem>>, %arg5: memref<1x1x128xi32, #tpu.memory_space<vmem>>, %arg6: memref<1x128x1xi32, #tpu.memory_space<vmem>>, %arg7: memref<1x128x128xf32, #tpu.memory_space<vmem>>, %arg8: memref<1x128x128xbf16, #tpu.memory_space<vmem>>) attributes {dimension_semantics = [#tpu.dimension_semantics<parallel>, #tpu.dimension_semantics<arbitrary>], iteration_bounds = array<i64: 4, 1>, scalar_prefetch = 0 : i64, scratch_operands = 0 : i64, tpu.core_type = #tpu.core_type<tc>, window_params = [{transform_indices = @transform_0, window_bounds = array<i64: 1, 128, 128>}, {transform_indices = @transform_1, window_bounds = array<i64: 1, 128, 128>}, {transform_indices = @transform_2, window_bounds = array<i64: 1, 128, 128>}, {transform_indices = @transform_3, window_bounds = array<i64: 1, 1, 128>}, {transform_indices = @transform_4, window_bounds = array<i64: 1, 128, 1>}, {transform_indices = @transform_5, window_bounds = array<i64: 1, 128, 128>}, {transform_indices = @transform_6, window_bounds = array<i64: 1, 128, 128>}]} {
    %c0 = arith.constant 0 : index
    %c0_0 = arith.constant 0 : index
    %c0_1 = arith.constant 0 : index
    %0 = vector.load %arg2[%c0, %c0_0, %c0_1] : memref<1x128x128xbf16, #tpu.memory_space<vmem>>, vector<1x128x128xbf16>
    %1 = vector.shape_cast %0 : vector<1x128x128xbf16> to vector<128x128xbf16>
    %c0_2 = arith.constant 0 : index
    %c0_3 = arith.constant 0 : index
    %c0_4 = arith.constant 0 : index
    %2 = vector.load %arg3[%c0_2, %c0_3, %c0_4] : memref<1x128x128xbf16, #tpu.memory_space<vmem>>, vector<1x128x128xbf16>
    %3 = vector.shape_cast %2 : vector<1x128x128xbf16> to vector<128x128xbf16>
    %c0_5 = arith.constant 0 : index
    %c0_6 = arith.constant 0 : index
    %c0_7 = arith.constant 0 : index
    %4 = vector.load %arg4[%c0_5, %c0_6, %c0_7] : memref<1x128x128xbf16, #tpu.memory_space<vmem>>, vector<1x128x128xbf16>
    %5 = vector.shape_cast %4 : vector<1x128x128xbf16> to vector<128x128xbf16>
    %cst = arith.constant dense<0.000000e+00> : vector<128x128xf32>
    %6 = tpu.matmul %1, %3, %cst {dimension_numbers = #tpu.dot_dimension_numbers<[1], [0], [0], [1], [0, 0, 1, 1], [], []>} : vector<128x128xbf16>, vector<128x128xbf16>, vector<128x128xf32> -> vector<128x128xf32>
    %cst_8 = arith.constant 0.0883883461 : f32
    %7 = vector.broadcast %cst_8 : f32 to vector<128x128xf32>
    %8 = arith.mulf %6, %7 : vector<128x128xf32>
    %c0_9 = arith.constant 0 : index
    %c0_10 = arith.constant 0 : index
    %c0_11 = arith.constant 0 : index
    %9 = vector.load %arg5[%c0_9, %c0_10, %c0_11] : memref<1x1x128xi32, #tpu.memory_space<vmem>>, vector<1x1x128xi32>
    %10 = vector.shape_cast %9 : vector<1x1x128xi32> to vector<1x128xi32>
    %c0_i32 = arith.constant 0 : i32
    %11 = vector.broadcast %c0_i32 : i32 to vector<1x128xi32>
    %12 = arith.cmpi ne, %10, %11 : vector<1x128xi32>
    %cst_12 = arith.constant -1.000000e+04 : f32
    %13 = vector.shape_cast %12 : vector<1x128xi1> to vector<1x128xi1>
    %14 = vector.broadcast %13 : vector<1x128xi1> to vector<128x128xi1>
    %15 = vector.broadcast %cst_12 : f32 to vector<128x128xf32>
    %16 = arith.select %14, %15, %8 : vector<128x128xi1>, vector<128x128xf32>
    %cst_13 = arith.constant dense<0xFF800000> : vector<128xf32>
    %17 = vector.multi_reduction <maximumf>, %16, %cst_13 [1] : vector<128x128xf32> to vector<128xf32>
    %18 = vector.shape_cast %17 : vector<128xf32> to vector<128x1xf32>
    %19 = vector.broadcast %18 : vector<128x1xf32> to vector<128x128xf32>
    %20 = arith.subf %16, %19 : vector<128x128xf32>
    %21 = math.exp %20 : vector<128x128xf32>
    %cst_14 = arith.constant dense<0.000000e+00> : vector<128xf32>
    %22 = vector.multi_reduction <add>, %21, %cst_14 [1] : vector<128x128xf32> to vector<128xf32>
    %23 = vector.shape_cast %22 : vector<128xf32> to vector<128x1xf32>
    %24 = tpu.reciprocal %23 {approx = true} : vector<128x1xf32> -> vector<128x1xf32>
    %25 = vector.broadcast %24 : vector<128x1xf32> to vector<128x128xf32>
    %26 = arith.mulf %21, %25 : vector<128x128xf32>
    %27 = arith.truncf %26 : vector<128x128xf32> to vector<128x128xbf16>
    %cst_15 = arith.constant dense<0.000000e+00> : vector<128x128xf32>
    %28 = tpu.matmul %27, %5, %cst_15 {dimension_numbers = #tpu.dot_dimension_numbers<[1], [0], [0], [1], [0, 0, 1, 1], [], []>} : vector<128x128xbf16>, vector<128x128xbf16>, vector<128x128xf32> -> vector<128x128xf32>
    %c0_16 = arith.constant 0 : index
    %c0_17 = arith.constant 0 : index
    %c0_18 = arith.constant 0 : index
    %29 = vector.load %arg7[%c0_16, %c0_17, %c0_18] : memref<1x128x128xf32, #tpu.memory_space<vmem>>, vector<1x128x128xf32>
    %30 = vector.shape_cast %29 : vector<1x128x128xf32> to vector<128x128xf32>
    %31 = vector.shape_cast %28 : vector<128x128xf32> to vector<1x128x128xf32>
    tpu.vector_store %arg7[%c0_16, %c0_17, %c0_18], %31 {strides = array<i32>} : memref<1x128x128xf32, #tpu.memory_space<vmem>>, vector<1x128x128xf32>,
    %c0_19 = arith.constant 0 : index
    %c0_20 = arith.constant 0 : index
    %c0_21 = arith.constant 0 : index
    %32 = vector.load %arg6[%c0_19, %c0_20, %c0_21] : memref<1x128x1xi32, #tpu.memory_space<vmem>>, vector<1x128x1xi32>
    %33 = vector.shape_cast %32 : vector<1x128x1xi32> to vector<128x1xi32>
    %c0_i32_22 = arith.constant 0 : i32
    %34 = vector.broadcast %c0_i32_22 : i32 to vector<128x1xi32>
    %35 = arith.cmpi ne, %33, %34 : vector<128x1xi32>
    %cst_23 = arith.constant 0.000000e+00 : f32
    %36 = vector.shape_cast %35 : vector<128x1xi1> to vector<128x1xi1>
    %37 = vector.broadcast %36 : vector<128x1xi1> to vector<128x128xi1>
    %38 = vector.broadcast %cst_23 : f32 to vector<128x128xf32>
    %39 = arith.select %37, %38, %26 : vector<128x128xi1>, vector<128x128xf32>
    %40 = arith.truncf %39 : vector<128x128xf32> to vector<128x128xbf16>
    %c0_24 = arith.constant 0 : index
    %c0_25 = arith.constant 0 : index
    %c0_26 = arith.constant 0 : index
    %41 = vector.load %arg8[%c0_24, %c0_25, %c0_26] : memref<1x128x128xbf16, #tpu.memory_space<vmem>>, vector<1x128x128xbf16>
    %42 = vector.shape_cast %41 : vector<1x128x128xbf16> to vector<128x128xbf16>
    %43 = vector.shape_cast %40 : vector<128x128xbf16> to vector<1x128x128xbf16>
    tpu.vector_store %arg8[%c0_24, %c0_25, %c0_26], %43 {strides = array<i32>} : memref<1x128x128xbf16, #tpu.memory_space<vmem>>, vector<1x128x128xbf16>,
    return
  }
  func.func @transform_0(%arg0: i32, %arg1: i32) -> (i32, i32, i32) {
    %c0_i32 = arith.constant 0 : i32
    %c0_i32_0 = arith.constant 0 : i32
    return %arg0, %arg1, %c0_i32 : i32, i32, i32
  }
  func.func @transform_1(%arg0: i32, %arg1: i32) -> (i32, i32, i32) {
    %c0_i32 = arith.constant 0 : i32
    %c0_i32_0 = arith.constant 0 : i32
    %c0_i32_1 = arith.constant 0 : i32
    return %arg0, %c0_i32, %c0_i32_0 : i32, i32, i32
  }
  func.func @transform_2(%arg0: i32, %arg1: i32) -> (i32, i32, i32) {
    %c0_i32 = arith.constant 0 : i32
    %c0_i32_0 = arith.constant 0 : i32
    %c0_i32_1 = arith.constant 0 : i32
    return %arg0, %c0_i32, %c0_i32_0 : i32, i32, i32
  }
  func.func @transform_3(%arg0: i32, %arg1: i32) -> (i32, i32, i32) {
    %c0_i32 = arith.constant 0 : i32
    %c0_i32_0 = arith.constant 0 : i32
    %c0_i32_1 = arith.constant 0 : i32
    return %arg0, %c0_i32, %c0_i32_0 : i32, i32, i32
  }
  func.func @transform_4(%arg0: i32, %arg1: i32) -> (i32, i32, i32) {
    %c0_i32 = arith.constant 0 : i32
    %c0_i32_0 = arith.constant 0 : i32
    return %arg0, %arg1, %c0_i32 : i32, i32, i32
  }
  func.func @transform_5(%arg0: i32, %arg1: i32) -> (i32, i32, i32) {
    %c0_i32 = arith.constant 0 : i32
    %c0_i32_0 = arith.constant 0 : i32
    return %arg0, %arg1, %c0_i32 : i32, i32, i32
  }
  func.func @transform_6(%arg0: i32, %arg1: i32) -> (i32, i32, i32) {
    %c0_i32 = arith.constant 0 : i32
    %c0_i32_0 = arith.constant 0 : i32
    return %arg0, %arg1, %c0_i32 : i32, i32, i32
  }
}

</mosaic_0001>

<llo_original>
// kernel: tpu_custom_call.1
$region0: #{tpu_custom_call.1}
  #allocation0 [shape = 'u32[]', space=smem, size = 0x4, offset = 0x4, fixed_abs, tag = 'smem constant byte address 0x4 - core index']
  #allocation1 [shape = 'u32[144,128]{1,0:T(1,128)}', space=vmem, size = 0x12000, scoped, tag = 'internal scratch']
  %s0 = inlined_call_operand.vmem [shape: bf16[4,128,128], index: 0, kind: input, shape index: {}]
  %s1 = inlined_call_operand.vmem [shape: bf16[4,128,128], index: 1, kind: input, shape index: {}]
  %s2 = inlined_call_operand.hbm [shape: bf16[4,128,128], index: 2, kind: input, shape index: {}]
  %s3 = inlined_call_operand.vmem [shape: s32[4,1,128], index: 3, kind: input, shape index: {}]
  %s4 = inlined_call_operand.vmem [shape: s32[4,128,1], index: 4, kind: input, shape index: {}]
  %s5 = inlined_call_operand.hbm [shape: f32[4,128,128], index: 5, kind: output, shape index: {0}]
  %s6 = inlined_call_operand.hbm [shape: bf16[4,128,128], index: 6, kind: output, shape index: {1}]
  %7 = xla_tuple %s5, %s6
  %s8 = sld [smem:[#allocation0]]
  $region65: #{tpu_custom_call.1} parent=0
    _
  %s10 = ssub.s32 1, %s8
  %s11 = scalar_select 0, %s10, %s8
  $region1: #{tpu_custom_call.1} parent=0
    #allocation2 [shape = 'u8[65536]{0}', space=vmem, size = 0x10000, scoped, tag = 'input window, operand 2']
    #allocation3 [shape = 's32[2]{0}', space=sflag, size = 0x8, scoped, tag = 'scoped memory for tpu_custom_call.1']
    #allocation4 [shape = 's32[2]{0}', space=sflag, size = 0x8, scoped, tag = 'scoped memory for tpu_custom_call.1']
    #allocation5 [shape = 'u8[131072]{0}', space=vmem, size = 0x20000, scoped, tag = 'output window, operand 0']
    #allocation6 [shape = 'u8[65536]{0}', space=vmem, size = 0x10000, scoped, tag = 'output window, operand 1']
    #allocation7 [shape = 's32[2]{0}', space=sflag, size = 0x8, scoped, tag = 'scoped memory for tpu_custom_call.1']
    %12 = vsyncpa [#allocation3], 0
    %s13 = scalar_lea.sflag [#allocation3], 1
    %14 = vsyncpa %s13, 0
    %15 = vsyncpa [#allocation4], 0
    %s16 = scalar_lea.sflag [#allocation4], 1
    %17 = vsyncpa %s16, 0
    %18 = vsyncpa [#allocation7], 0
    %s19 = scalar_lea.sflag [#allocation7], 1
    %20 = vsyncpa %s19, 0
    loop: start=0, step=1, limit=6
    $region2: #{tpu_custom_call.1} parent=1 // loop_pre_header
      _
    $region3: #{tpu_custom_call.1} parent=1 // loop_header
      %s22 = sphi 0, %s26
      %p23 = scmp.ge.s32.totalorder %s22, 6
      %s29 = sphi 0, %s41
      %s30 = sphi 0, %s37
      %s31 = sphi 0, %s29
      %s32 = sphi 0, %s30
      %s33 = sphi 0, %s31
      %s34 = sphi 0, %s32
      %s46 = sphi 0, %s48
      %s49 = sphi 0, %s46
      %s50 = sphi 0, %s49
      %s66 = sphi 0, %s50
      %s72 = sphi 0, %s74
      %s75 = sphi 0, %s72
      %s76 = sphi 0, %s75
      %s92 = sphi 0, %s76
      %s98 = sphi 0, %s100
      %s101 = sphi 0, %s98
      %s102 = sphi 0, %s101
      %s118 = sphi 0, %s102
      %s124 = sphi 0, %s126
      %s127 = sphi 0, %s124
      %s128 = sphi 0, %s127
      %s144 = sphi 0, %s128
      %s152 = sphi 0, %s154
      %s155 = sphi 0, %s152
      %s156 = sphi 0, %s155
      %s172 = sphi 0, %s156
      %s180 = sphi 0, %s182
      %s183 = sphi 0, %s180
      %s184 = sphi 0, %s183
      %s200 = sphi 0, %s184
      %s208 = sphi 0, %s210
      %s211 = sphi 0, %s208
      %s212 = sphi 0, %s211
      %s228 = sphi 0, %s212
    $region4: #{tpu_custom_call.1} parent=1 // loop_header_branch
      %25 = sbr.rel (%p23) target = $region8
    $region5: #{tpu_custom_call.1} parent=1 // loop_body
      %s27 = ssub.s32 %s22, 1
      %s28 = ssub.s32 %s22, 2
      %s35 = sadd.s32 1, %s30
      %p36 = scmp.ge.s32.totalorder %s35, 1
      %s37 = scalar_select %p36, 0, %s35
      %s38 = sadd.s32 1, %s29
      %s39 = scalar_select %p36, %s38, %s29
      %p40 = scmp.ge.s32.totalorder %s39, 4
      %s41 = scalar_select %p40, 0, %s39
      %s42 = ssub.s32 %s29, %s41
      %s43 = ssub.s32 %s30, %s37
      %s44 = sor.u32 %s42, %s43
      %p45 = scmp.eq.s32.totalorder %s44, 0
      %s47 = sadd.s32 %s46, 1
      %s48 = scalar_select %p45, %s46, %s47
      %p51 = pneg %p45
      %p52 = scmp.eq.s32.totalorder %s22, 3
      %p53 = por %p51, %p52
      %p54 = scmp.ne.s32.totalorder %s46, %s49
      %p55 = scmp.eq.s32.totalorder %s22, 0
      %p56 = por %p54, %p55
      %p57 = scmp.ne.s32.totalorder %s46, %s49
      %p58 = scmp.eq.s32.totalorder %s27, 3
      %p59 = por %p57, %p58
      %p60 = scmp.ne.s32.totalorder %s49, %s50
      %p61 = scmp.eq.s32.totalorder %s27, 0
      %p62 = por %p60, %p61
      %p63 = scmp.ne.s32.totalorder %s49, %s50
      %p64 = scmp.eq.s32.totalorder %s28, 3
      %p65 = por %p63, %p64
      %p67 = scmp.ne.s32.totalorder %s50, %s66
      %p68 = scmp.eq.s32.totalorder %s28, 0
      %p69 = por %p67, %p68
      %s70 = ssub.s32 %s29, %s41
      %p71 = scmp.eq.s32.totalorder %s70, 0
      %s73 = sadd.s32 %s72, 1
      %s74 = scalar_select %p71, %s72, %s73
      %p77 = pneg %p71
      %p78 = scmp.eq.s32.totalorder %s22, 3
      %p79 = por %p77, %p78
      %p80 = scmp.ne.s32.totalorder %s72, %s75
      %p81 = scmp.eq.s32.totalorder %s22, 0
      %p82 = por %p80, %p81
      %p83 = scmp.ne.s32.totalorder %s72, %s75
      %p84 = scmp.eq.s32.totalorder %s27, 3
      %p85 = por %p83, %p84
      %p86 = scmp.ne.s32.totalorder %s75, %s76
      %p87 = scmp.eq.s32.totalorder %s27, 0
      %p88 = por %p86, %p87
      %p89 = scmp.ne.s32.totalorder %s75, %s76
      %p90 = scmp.eq.s32.totalorder %s28, 3
      %p91 = por %p89, %p90
      %p93 = scmp.ne.s32.totalorder %s76, %s92
      %p94 = scmp.eq.s32.totalorder %s28, 0
      %p95 = por %p93, %p94
      %s96 = ssub.s32 %s29, %s41
      %p97 = scmp.eq.s32.totalorder %s96, 0
      %s99 = sadd.s32 %s98, 1
      %s100 = scalar_select %p97, %s98, %s99
      %p103 = pneg %p97
      %p104 = scmp.eq.s32.totalorder %s22, 3
      %p105 = por %p103, %p104
      %p106 = scmp.ne.s32.totalorder %s98, %s101
      %p107 = scmp.eq.s32.totalorder %s22, 0
      %p108 = por %p106, %p107
      %p109 = scmp.ne.s32.totalorder %s98, %s101
      %p110 = scmp.eq.s32.totalorder %s27, 3
      %p111 = por %p109, %p110
      %p112 = scmp.ne.s32.totalorder %s101, %s102
      %p113 = scmp.eq.s32.totalorder %s27, 0
      %p114 = por %p112, %p113
      %p115 = scmp.ne.s32.totalorder %s101, %s102
      %p116 = scmp.eq.s32.totalorder %s28, 3
      %p117 = por %p115, %p116
      %p119 = scmp.ne.s32.totalorder %s102, %s118
      %p120 = scmp.eq.s32.totalorder %s28, 0
      %p121 = por %p119, %p120
      %s122 = ssub.s32 %s29, %s41
      %p123 = scmp.eq.s32.totalorder %s122, 0
      %s125 = sadd.s32 %s124, 1
      %s126 = scalar_select %p123, %s124, %s125
      %p129 = pneg %p123
      %p130 = scmp.eq.s32.totalorder %s22, 3
      %p131 = por %p129, %p130
      %p132 = scmp.ne.s32.totalorder %s124, %s127
      %p133 = scmp.eq.s32.totalorder %s22, 0
      %p134 = por %p132, %p133
      %p135 = scmp.ne.s32.totalorder %s124, %s127
      %p136 = scmp.eq.s32.totalorder %s27, 3
      %p137 = por %p135, %p136
      %p138 = scmp.ne.s32.totalorder %s127, %s128
      %p139 = scmp.eq.s32.totalorder %s27, 0
      %p140 = por %p138, %p139
      %p141 = scmp.ne.s32.totalorder %s127, %s128
      %p142 = scmp.eq.s32.totalorder %s28, 3
      %p143 = por %p141, %p142
      %p145 = scmp.ne.s32.totalorder %s128, %s144
      %p146 = scmp.eq.s32.totalorder %s28, 0
      %p147 = por %p145, %p146
      %s148 = ssub.s32 %s29, %s41
      %s149 = ssub.s32 %s30, %s37
      %s150 = sor.u32 %s148, %s149
      %p151 = scmp.eq.s32.totalorder %s150, 0
      %s153 = sadd.s32 %s152, 1
      %s154 = scalar_select %p151, %s152, %s153
      %p157 = pneg %p151
      %p158 = scmp.eq.s32.totalorder %s22, 3
      %p159 = por %p157, %p158
      %p160 = scmp.ne.s32.totalorder %s152, %s155
      %p161 = scmp.eq.s32.totalorder %s22, 0
      %p162 = por %p160, %p161
      %p163 = scmp.ne.s32.totalorder %s152, %s155
      %p164 = scmp.eq.s32.totalorder %s27, 3
      %p165 = por %p163, %p164
      %p166 = scmp.ne.s32.totalorder %s155, %s156
      %p167 = scmp.eq.s32.totalorder %s27, 0
      %p168 = por %p166, %p167
      %p169 = scmp.ne.s32.totalorder %s155, %s156
      %p170 = scmp.eq.s32.totalorder %s28, 3
      %p171 = por %p169, %p170
      %p173 = scmp.ne.s32.totalorder %s156, %s172
      %p174 = scmp.eq.s32.totalorder %s28, 0
      %p175 = por %p173, %p174
      %s176 = ssub.s32 %s29, %s41
      %s177 = ssub.s32 %s30, %s37
      %s178 = sor.u32 %s176, %s177
      %p179 = scmp.eq.s32.totalorder %s178, 0
      %s181 = sadd.s32 %s180, 1
      %s182 = scalar_select %p179, %s180, %s181
      %p185 = pneg %p179
      %p186 = scmp.eq.s32.totalorder %s22, 3
      %p187 = por %p185, %p186
      %p188 = scmp.ne.s32.totalorder %s180, %s183
      %p189 = scmp.eq.s32.totalorder %s22, 0
      %p190 = por %p188, %p189
      %p191 = scmp.ne.s32.totalorder %s180, %s183
      %p192 = scmp.eq.s32.totalorder %s27, 3
      %p193 = por %p191, %p192
      %p194 = scmp.ne.s32.totalorder %s183, %s184
      %p195 = scmp.eq.s32.totalorder %s27, 0
      %p196 = por %p194, %p195
      %p197 = scmp.ne.s32.totalorder %s183, %s184
      %p198 = scmp.eq.s32.totalorder %s28, 3
      %p199 = por %p197, %p198
      %p201 = scmp.ne.s32.totalorder %s184, %s200
      %p202 = scmp.eq.s32.totalorder %s28, 0
      %p203 = por %p201, %p202
      %s204 = ssub.s32 %s29, %s41
      %s205 = ssub.s32 %s30, %s37
      %s206 = sor.u32 %s204, %s205
      %p207 = scmp.eq.s32.totalorder %s206, 0
      %s209 = sadd.s32 %s208, 1
      %s210 = scalar_select %p207, %s208, %s209
      %p213 = pneg %p207
      %p214 = scmp.eq.s32.totalorder %s22, 3
      %p215 = por %p213, %p214
      %p216 = scmp.ne.s32.totalorder %s208, %s211
      %p217 = scmp.eq.s32.totalorder %s22, 0
      %p218 = por %p216, %p217
      %p219 = scmp.ne.s32.totalorder %s208, %s211
      %p220 = scmp.eq.s32.totalorder %s27, 3
      %p221 = por %p219, %p220
      %p222 = scmp.ne.s32.totalorder %s211, %s212
      %p223 = scmp.eq.s32.totalorder %s27, 0
      %p224 = por %p222, %p223
      %p225 = scmp.ne.s32.totalorder %s211, %s212
      %p226 = scmp.eq.s32.totalorder %s28, 3
      %p227 = por %p225, %p226
      %p229 = scmp.ne.s32.totalorder %s212, %s228
      %p230 = scmp.eq.s32.totalorder %s28, 0
      %p231 = por %p229, %p230
      %p232 = scmp.le.s32.totalorder 1, %s22
      %p233 = scmp.lt.s32.totalorder %s22, 5
      %p234 = pnand %p232, %p233
      %p235 = pneg %p234
      // Predicated region
      $region9: #{tpu_custom_call.1} parent=5 // pred_check
        _
      $region10: #{tpu_custom_call.1} parent=5 // pred_check_branch
        %237 = sbr.rel (%p234) target = $region12
      $region11: #{tpu_custom_call.1} parent=5 // pred_region
        %s238 = ssub.s32 %s22, 1
      $region12: #{tpu_custom_call.1} parent=5 // pred_fallthru
        _
      %p239 = scmp.lt.s32.totalorder %s22, 4
      // Predicated region
      $region13: #{tpu_custom_call.1} parent=5 // pred_check
        %p240 = pneg %p239
      $region14: #{tpu_custom_call.1} parent=5 // pred_check_branch
        %242 = sbr.rel (%p240) target = $region16
      $region15: #{tpu_custom_call.1} parent=5 // pred_region
        // Predicated region
        $region17: #{tpu_custom_call.1} parent=15 // pred_check
          %p243 = pneg %p56
        $region18: #{tpu_custom_call.1} parent=15 // pred_check_branch
          %245 = sbr.rel (%p243) target = $region20
        $region19: #{tpu_custom_call.1} parent=15 // pred_region
          %s246 = smul.u32 16, %s30
          %p247 = scmp.lt.s32.totalorder %s29, 3
          %s248 = scalar_select %p247, %s29, 3
          %p249 = scmp.lt.s32.totalorder %s246, 15
          %s250 = scalar_select %p249, %s246, 15
          %s251 = smul.addr %s248, 16
          %s252 = sadd.s32 %s250, %s251
          %s253 = smul.addr %s252, 4
          %s254 = scalar_lea.vmem %s0, %s253
          %s255 = smul.u32 16, %s30
        $region20: #{tpu_custom_call.1} parent=15 // pred_fallthru
          _
        // Predicated region
        $region21: #{tpu_custom_call.1} parent=15 // pred_check
          %p256 = pneg %p82
        $region22: #{tpu_custom_call.1} parent=15 // pred_check_branch
          %258 = sbr.rel (%p256) target = $region24
        $region23: #{tpu_custom_call.1} parent=15 // pred_region
          %p259 = scmp.lt.s32.totalorder %s29, 3
          %s260 = scalar_select %p259, %s29, 3
          %s261 = smul.addr %s260, 16
          %s262 = smul.addr %s261, 4
          %s263 = scalar_lea.vmem %s1, %s262
        $region24: #{tpu_custom_call.1} parent=15 // pred_fallthru
          _
        // Predicated region
        $region25: #{tpu_custom_call.1} parent=15 // pred_check
          %p264 = pneg %p108
        $region26: #{tpu_custom_call.1} parent=15 // pred_check_branch
          %266 = sbr.rel (%p264) target = $region28
        $region27: #{tpu_custom_call.1} parent=15 // pred_region
          %s267 = sand.u32 %s98, 1
          %s268 = scalar_lea.sflag [#allocation3], %s267
          %s269 = sand.u32 %s98, 1
          %s270 = smul.addr %s269, 64
          %s271 = scalar_lea.vmem [#allocation2], %s270
          %s273 = ssub.s32 1024, 1024
          %274 = vsyncadd %s268, %s273
          %s275 = smul.addr %s29, 16
          %s276 = smul.addr %s275, 64
          %s277 = scalar_lea.hbm %s2, %s276
          %s278 = sshll.u32 %s271, 4
          %s279 = int_to_ptr.vmem [resolvable:$true] %s278
          %284 = dma.hbm_to_vmem [thread:$0]  %s277, 1024, %s279, %s268, 64, 64, 4
        $region28: #{tpu_custom_call.1} parent=15 // pred_fallthru
          _
        // Predicated region
        $region29: #{tpu_custom_call.1} parent=15 // pred_check
          %p285 = pneg %p134
        $region30: #{tpu_custom_call.1} parent=15 // pred_check_branch
          %287 = sbr.rel (%p285) target = $region32
        $region31: #{tpu_custom_call.1} parent=15 // pred_region
          %p288 = scmp.lt.s32.totalorder %s29, 3
          %s289 = scalar_select %p288, %s29, 3
          %s290 = scalar_lea.vmem %s3, %s289
        $region32: #{tpu_custom_call.1} parent=15 // pred_fallthru
          _
        // Predicated region
        $region33: #{tpu_custom_call.1} parent=15 // pred_check
          %p291 = pneg %p162
        $region34: #{tpu_custom_call.1} parent=15 // pred_check_branch
          %293 = sbr.rel (%p291) target = $region36
        $region35: #{tpu_custom_call.1} parent=15 // pred_region
          %s294 = smul.u32 16, %s30
          %p295 = scmp.lt.s32.totalorder %s29, 3
          %s296 = scalar_select %p295, %s29, 3
          %p297 = scmp.lt.s32.totalorder %s294, 15
          %s298 = scalar_select %p297, %s294, 15
          %s299 = smul.addr %s296, 16
          %s300 = sadd.s32 %s298, %s299
          %s301 = smul.addr %s300, 8
          %s302 = scalar_lea.vmem %s4, %s301
          %s303 = smul.u32 16, %s30
        $region36: #{tpu_custom_call.1} parent=15 // pred_fallthru
          _
      $region16: #{tpu_custom_call.1} parent=5 // pred_fallthru
        _
      %p304 = scmp.le.s32.totalorder 1, %s22
      %p305 = scmp.lt.s32.totalorder %s22, 5
      %p306 = pnand %p304, %p305
      %p307 = pneg %p306
      // Predicated region
      $region37: #{tpu_custom_call.1} parent=5 // pred_check
        _
      $region38: #{tpu_custom_call.1} parent=5 // pred_check_branch
        %309 = sbr.rel (%p306) target = $region40
      $region39: #{tpu_custom_call.1} parent=5 // pred_region
        %s310 = ssub.s32 %s22, 1
        %s311 = sand.u32 %s101, 1
        %s312 = scalar_lea.sflag [#allocation3], %s311
        %s313 = sand.u32 %s101, 1
        %s314 = smul.addr %s313, 64
        %s315 = scalar_lea.vmem [#allocation2], %s314
        // Predicated region
        $region41: #{tpu_custom_call.1} parent=39 // pred_check
          %p316 = pneg %p114
        $region42: #{tpu_custom_call.1} parent=39 // pred_check_branch
          %318 = sbr.rel (%p316) target = $region44
        $region43: #{tpu_custom_call.1} parent=39 // pred_region
          %319 = dma.done %s312, 1024
        $region44: #{tpu_custom_call.1} parent=39 // pred_fallthru
          _
        %s320 = smul.u32 16, %s32
        %p321 = scmp.lt.s32.totalorder %s31, 3
        %s322 = scalar_select %p321, %s31, 3
        %p323 = scmp.lt.s32.totalorder %s320, 15
        %s324 = scalar_select %p323, %s320, 15
        %s325 = smul.addr %s322, 16
        %s326 = sadd.s32 %s324, %s325
        %s327 = smul.addr %s326, 4
        %s328 = scalar_lea.vmem %s0, %s327
        %p329 = pneg %p62
        %p330 = pneg %p59
        %p331 = scmp.lt.s32.totalorder %s31, 3
        %s332 = scalar_select %p331, %s31, 3
        %s333 = smul.addr %s332, 16
        %s334 = smul.addr %s333, 4
        %s335 = scalar_lea.vmem %s1, %s334
        %p336 = pneg %p88
        %p337 = pneg %p85
        %s338 = sand.u32 %s101, 1
        %s339 = scalar_lea.sflag [#allocation3], %s338
        %s340 = sand.u32 %s101, 1
        %s341 = smul.addr %s340, 64
        %s342 = scalar_lea.vmem [#allocation2], %s341
        %p343 = pneg %p114
        %p344 = pneg %p111
        %p345 = scmp.lt.s32.totalorder %s31, 3
        %s346 = scalar_select %p345, %s31, 3
        %s347 = scalar_lea.vmem %s3, %s346
        %p348 = pneg %p140
        %p349 = pneg %p137
        %s350 = smul.u32 16, %s32
        %p351 = scmp.lt.s32.totalorder %s31, 3
        %s352 = scalar_select %p351, %s31, 3
        %p353 = scmp.lt.s32.totalorder %s350, 15
        %s354 = scalar_select %p353, %s350, 15
        %s355 = smul.addr %s352, 16
        %s356 = sadd.s32 %s354, %s355
        %s357 = smul.addr %s356, 8
        %s358 = scalar_lea.vmem %s4, %s357
        %p359 = pneg %p168
        %p360 = pneg %p165
        %p361 = pneg %p196
        %p362 = pneg %p193
        %s363 = sand.u32 %s183, 1
        %s364 = scalar_lea.sflag [#allocation4], %s363
        %s365 = sand.u32 %s183, 1
        %s366 = smul.addr %s365, 128
        %s367 = scalar_lea.vmem [#allocation5], %s366
        %p368 = pneg %p224
        %p369 = pneg %p221
        %s370 = sand.u32 %s211, 1
        %s371 = scalar_lea.sflag [#allocation7], %s370
        %s372 = sand.u32 %s211, 1
        %s373 = smul.addr %s372, 64
        %s374 = scalar_lea.vmem [#allocation6], %s373
        %s375 = smul.u32 16, %s32
        %p376 = scmp.lt.s32.totalorder %s31, 3
        %s377 = scalar_select %p376, %s31, 3
        %p378 = scmp.lt.s32.totalorder %s375, 15
        %s379 = scalar_select %p378, %s375, 15
        %s380 = smul.addr %s377, 16
        %s381 = sadd.s32 %s379, %s380
        %s382 = smul.addr %s381, 4
        %s383 = scalar_lea.vmem %s0, %s382
        %s384 = smul.u32 16, %s32
        %p385 = scmp.lt.s32.totalorder %s31, 3
        %s386 = scalar_select %p385, %s31, 3
        %s387 = smul.addr %s386, 16
        %s388 = smul.addr %s387, 4
        %s389 = scalar_lea.vmem %s1, %s388
        %p390 = scmp.lt.s32.totalorder %s31, 3
        %s391 = scalar_select %p390, %s31, 3
        %s392 = scalar_lea.vmem %s3, %s391
        %s393 = smul.u32 16, %s32
        %p394 = scmp.lt.s32.totalorder %s31, 3
        %s395 = scalar_select %p394, %s31, 3
        %p396 = scmp.lt.s32.totalorder %s393, 15
        %s397 = scalar_select %p396, %s393, 15
        %s398 = smul.addr %s395, 16
        %s399 = sadd.s32 %s397, %s398
        %s400 = smul.addr %s399, 8
        %s401 = scalar_lea.vmem %s4, %s400
        %s402 = smul.u32 16, %s32
        %s403 = smul.u32 16, %s32
        %s404 = smul.u32 16, %s32
        %v406 = vld [vmem:[%s383] sm:$0xf]
        %v407 = vld [vmem:[%s383 + $0x4] sm:$0xf]
        %v408 = vld [vmem:[%s383 + $0x8] sm:$0xf]
        %v409 = vld [vmem:[%s383 + $0xc] sm:$0xf]
        %v410 = vld [vmem:[%s383 + $0x10] sm:$0xf]
        %v411 = vld [vmem:[%s383 + $0x14] sm:$0xf]
        %v412 = vld [vmem:[%s383 + $0x18] sm:$0xf]
        %v413 = vld [vmem:[%s383 + $0x1c] sm:$0xf]
        %v414 = vld [vmem:[%s383 + $0x20] sm:$0xf]
        %v415 = vld [vmem:[%s383 + $0x24] sm:$0xf]
        %v416 = vld [vmem:[%s383 + $0x28] sm:$0xf]
        %v417 = vld [vmem:[%s383 + $0x2c] sm:$0xf]
        %v418 = vld [vmem:[%s383 + $0x30] sm:$0xf]
        %v419 = vld [vmem:[%s383 + $0x34] sm:$0xf]
        %v420 = vld [vmem:[%s383 + $0x38] sm:$0xf]
        %v421 = vld [vmem:[%s383 + $0x3c] sm:$0xf]
        %v422 = vld [vmem:[%s389] sm:$0xf]
        %v423 = vld [vmem:[%s389 + $0x4] sm:$0xf]
        %v424 = vld [vmem:[%s389 + $0x8] sm:$0xf]
        %v425 = vld [vmem:[%s389 + $0xc] sm:$0xf]
        %v426 = vld [vmem:[%s389 + $0x10] sm:$0xf]
        %v427 = vld [vmem:[%s389 + $0x14] sm:$0xf]
        %v428 = vld [vmem:[%s389 + $0x18] sm:$0xf]
        %v429 = vld [vmem:[%s389 + $0x1c] sm:$0xf]
        %v430 = vld [vmem:[%s389 + $0x20] sm:$0xf]
        %v431 = vld [vmem:[%s389 + $0x24] sm:$0xf]
        %v432 = vld [vmem:[%s389 + $0x28] sm:$0xf]
        %v433 = vld [vmem:[%s389 + $0x2c] sm:$0xf]
        %v434 = vld [vmem:[%s389 + $0x30] sm:$0xf]
        %v435 = vld [vmem:[%s389 + $0x34] sm:$0xf]
        %v436 = vld [vmem:[%s389 + $0x38] sm:$0xf]
        %v437 = vld [vmem:[%s389 + $0x3c] sm:$0xf]
        %v438 = vld [vmem:[%s315] sm:$0xf]
        %v439 = vld [vmem:[%s315 + $0x4] sm:$0xf]
        %v440 = vld [vmem:[%s315 + $0x8] sm:$0xf]
        %v441 = vld [vmem:[%s315 + $0xc] sm:$0xf]
        %v442 = vld [vmem:[%s315 + $0x10] sm:$0xf]
        %v443 = vld [vmem:[%s315 + $0x14] sm:$0xf]
        %v444 = vld [vmem:[%s315 + $0x18] sm:$0xf]
        %v445 = vld [vmem:[%s315 + $0x1c] sm:$0xf]
        %v446 = vld [vmem:[%s315 + $0x20] sm:$0xf]
        %v447 = vld [vmem:[%s315 + $0x24] sm:$0xf]
        %v448 = vld [vmem:[%s315 + $0x28] sm:$0xf]
        %v449 = vld [vmem:[%s315 + $0x2c] sm:$0xf]
        %v450 = vld [vmem:[%s315 + $0x30] sm:$0xf]
        %v451 = vld [vmem:[%s315 + $0x34] sm:$0xf]
        %v452 = vld [vmem:[%s315 + $0x38] sm:$0xf]
        %v453 = vld [vmem:[%s315 + $0x3c] sm:$0xf]
        %v470 = vunpack.c.l.b16 %v406
        %v471 = vunpack.c.l.b16 %v407
        %v472 = vunpack.c.l.b16 %v408
        %v473 = vunpack.c.l.b16 %v409
        %v474 = vunpack.c.l.b16 %v410
        %v475 = vunpack.c.l.b16 %v411
        %v476 = vunpack.c.l.b16 %v412
        %v477 = vunpack.c.l.b16 %v413
        %v478 = vunpack.c.l.b16 %v414
        %v479 = vunpack.c.l.b16 %v415
        %v480 = vunpack.c.l.b16 %v416
        %v481 = vunpack.c.l.b16 %v417
        %v482 = vunpack.c.l.b16 %v418
        %v483 = vunpack.c.l.b16 %v419
        %v484 = vunpack.c.l.b16 %v420
        %v485 = vunpack.c.l.b16 %v421
        %v486 = vpack.c.b16 %v471, %v470
        %v487 = vpack.c.b16 %v473, %v472
        %v488 = vpack.c.b16 %v475, %v474
        %v489 = vpack.c.b16 %v477, %v476
        %v490 = vpack.c.b16 %v479, %v478
        %v491 = vpack.c.b16 %v481, %v480
        %v492 = vpack.c.b16 %v483, %v482
        %v493 = vpack.c.b16 %v485, %v484
        %v518 = vunpack.c.l.b16 %v422
        %v519 = vunpack.c.l.b16 %v423
        %v520 = vunpack.c.l.b16 %v424
        %v521 = vunpack.c.l.b16 %v425
        %v522 = vunpack.c.l.b16 %v426
        %v523 = vunpack.c.l.b16 %v427
        %v524 = vunpack.c.l.b16 %v428
        %v525 = vunpack.c.l.b16 %v429
        %v526 = vunpack.c.l.b16 %v430
        %v527 = vunpack.c.l.b16 %v431
        %v528 = vunpack.c.l.b16 %v432
        %v529 = vunpack.c.l.b16 %v433
        %v530 = vunpack.c.l.b16 %v434
        %v531 = vunpack.c.l.b16 %v435
        %v532 = vunpack.c.l.b16 %v436
        %v533 = vunpack.c.l.b16 %v437
        %v534 = vpack.c.b16 %v519, %v518
        %v535 = vpack.c.b16 %v521, %v520
        %v536 = vpack.c.b16 %v523, %v522
        %v537 = vpack.c.b16 %v525, %v524
        %v538 = vpack.c.b16 %v527, %v526
        %v539 = vpack.c.b16 %v529, %v528
        %v540 = vpack.c.b16 %v531, %v530
        %v541 = vpack.c.b16 %v533, %v532
        %550 = vmatprep.subr.bf16.mxu0 0
        %551 = vmatpush1.bf16.msra.mxu0 %v541
        %552 = vmatprep.subr.bf16.mxu0 0
        %553 = vmatpush1.bf16.msra.mxu0 %v540
        %554 = vmatprep.subr.bf16.mxu0 0
        %555 = vmatpush1.bf16.msra.mxu0 %v539
        %556 = vmatprep.subr.bf16.mxu0 0
        %557 = vmatpush1.bf16.msra.mxu0 %v538
        %558 = vmatprep.subr.bf16.mxu0 0
        %559 = vmatpush1.bf16.msra.mxu0 %v537
        %560 = vmatprep.subr.bf16.mxu0 0
        %561 = vmatpush1.bf16.msra.mxu0 %v536
        %562 = vmatprep.subr.bf16.mxu0 0
        %563 = vmatpush1.bf16.msra.mxu0 %v535
        %564 = vmatprep.subr.bf16.mxu0 0
        %565 = vmatpush1.bf16.msra.mxu0 %v534
        %566 = vmatprep.subr.bf16.mxu0 0
        %567 = vmatpush2.bf16.msra.mxu0 0
        %568 = vmatprep.subr.bf16.mxu0 0
        %569 = vmatpush2.bf16.msra.mxu0 0
        %570 = vmatprep.subr.bf16.mxu0 0
        %571 = vmatpush2.bf16.msra.mxu0 0
        %572 = vmatprep.subr.bf16.mxu0 0
        %573 = vmatpush2.bf16.msra.mxu0 0
        %574 = vmatprep.subr.bf16.mxu0 0
        %575 = vmatpush2.bf16.msra.mxu0 0
        %576 = vmatprep.subr.bf16.mxu0 0
        %577 = vmatpush2.bf16.msra.mxu0 0
        %578 = vmatprep.subr.bf16.mxu0 0
        %579 = vmatpush2.bf16.msra.mxu0 0
        %580 = vmatprep.subr.bf16.mxu0 0
        %581 = vmatpush2.bf16.msra.mxu0 0
        %582 = vmatprep.mubr.bf16.mxu0 0
        %583 = vmatmul.mubr.bf16.gmra.mxu0 %v486
        %v584 = vpop.f32.mrf.mxu0
        %v585 = vadd.f32 0.0, %v584
        %v586 = vpop.f32.mrf.mxu0
        %v587 = vpop.f32.mrf.mxu0
        %v588 = vadd.f32 0.0, %v587
        %v589 = vpop.f32.mrf.mxu0
        %590 = vmatprep.mubr.bf16.mxu0 0
        %591 = vmatmul.mubr.bf16.gmra.mxu0 %v487
        %v592 = vpop.f32.mrf.mxu0
        %v593 = vadd.f32 0.0, %v592
        %v594 = vpop.f32.mrf.mxu0
        %v595 = vpop.f32.mrf.mxu0
        %v596 = vadd.f32 0.0, %v595
        %v597 = vpop.f32.mrf.mxu0
        %598 = vmatprep.mubr.bf16.mxu0 0
        %599 = vmatmul.mubr.bf16.gmra.mxu0 %v488
        %v600 = vpop.f32.mrf.mxu0
        %v601 = vadd.f32 0.0, %v600
        %v602 = vpop.f32.mrf.mxu0
        %v603 = vpop.f32.mrf.mxu0
        %v604 = vadd.f32 0.0, %v603
        %v605 = vpop.f32.mrf.mxu0
        %606 = vmatprep.mubr.bf16.mxu0 0
        %607 = vmatmul.mubr.bf16.gmra.mxu0 %v489
        %v608 = vpop.f32.mrf.mxu0
        %v609 = vadd.f32 0.0, %v608
        %v610 = vpop.f32.mrf.mxu0
        %v611 = vpop.f32.mrf.mxu0
        %v612 = vadd.f32 0.0, %v611
        %v613 = vpop.f32.mrf.mxu0
        %614 = vmatprep.mubr.bf16.mxu0 0
        %615 = vmatmul.mubr.bf16.gmra.mxu0 %v490
        %v616 = vpop.f32.mrf.mxu0
        %v617 = vadd.f32 0.0, %v616
        %v618 = vpop.f32.mrf.mxu0
        %v619 = vpop.f32.mrf.mxu0
        %v620 = vadd.f32 0.0, %v619
        %v621 = vpop.f32.mrf.mxu0
        %622 = vmatprep.mubr.bf16.mxu0 0
        %623 = vmatmul.mubr.bf16.gmra.mxu0 %v491
        %v624 = vpop.f32.mrf.mxu0
        %v625 = vadd.f32 0.0, %v624
        %v626 = vpop.f32.mrf.mxu0
        %v627 = vpop.f32.mrf.mxu0
        %v628 = vadd.f32 0.0, %v627
        %v629 = vpop.f32.mrf.mxu0
        %630 = vmatprep.mubr.bf16.mxu0 0
        %631 = vmatmul.mubr.bf16.gmra.mxu0 %v492
        %v632 = vpop.f32.mrf.mxu0
        %v633 = vadd.f32 0.0, %v632
        %v634 = vpop.f32.mrf.mxu0
        %v635 = vpop.f32.mrf.mxu0
        %v636 = vadd.f32 0.0, %v635
        %v637 = vpop.f32.mrf.mxu0
        %638 = vmatprep.mubr.bf16.mxu0 0
        %639 = vmatmul.mubr.bf16.gmra.mxu0 %v493
        %v640 = vpop.f32.mrf.mxu0
        %v641 = vadd.f32 0.0, %v640
        %v642 = vpop.f32.mrf.mxu0
        %v643 = vpop.f32.mrf.mxu0
        %v644 = vadd.f32 0.0, %v643
        %v645 = vpop.f32.mrf.mxu0
        %646 = vdwg.mxu0
        %v647 = vmul.f32 %v585, 0.088388346
        %v648 = vmul.f32 %v588, 0.088388346
        %v649 = vmul.f32 %v593, 0.088388346
        %v650 = vmul.f32 %v596, 0.088388346
        %v651 = vmul.f32 %v601, 0.088388346
        %v652 = vmul.f32 %v604, 0.088388346
        %v653 = vmul.f32 %v609, 0.088388346
        %v654 = vmul.f32 %v612, 0.088388346
        %v655 = vmul.f32 %v617, 0.088388346
        %v656 = vmul.f32 %v620, 0.088388346
        %v657 = vmul.f32 %v625, 0.088388346
        %v658 = vmul.f32 %v628, 0.088388346
        %v659 = vmul.f32 %v633, 0.088388346
        %v660 = vmul.f32 %v636, 0.088388346
        %v661 = vmul.f32 %v641, 0.088388346
        %v662 = vmul.f32 %v644, 0.088388346
        %v663 = vld [vmem:[%s392] sm:$0x1]
        %vm664 = vcmp.ne.s32.totalorder %v663, 0
        %v665 = vsel %vm664, 1, 0
        %v666 = vlaneseq
        %v667 = vshrl.u32 %v666, 7
        %v668 = vsub.s32 0, %v667
        %v669 = vrot.slane %v665, %v668
        %vm670 = vcmp.eq.s32.totalorder %v669, 1
        %v671 = vsel %vm670, -10000.0, %v647
        %v672 = vsel %vm670, -10000.0, %v648
        %v673 = vsel %vm670, -10000.0, %v649
        %v674 = vsel %vm670, -10000.0, %v650
        %v675 = vsel %vm670, -10000.0, %v651
        %v676 = vsel %vm670, -10000.0, %v652
        %v677 = vsel %vm670, -10000.0, %v653
        %v678 = vsel %vm670, -10000.0, %v654
        %v679 = vsel %vm670, -10000.0, %v655
        %v680 = vsel %vm670, -10000.0, %v656
        %v681 = vsel %vm670, -10000.0, %v657
        %v682 = vsel %vm670, -10000.0, %v658
        %v683 = vsel %vm670, -10000.0, %v659
        %v684 = vsel %vm670, -10000.0, %v660
        %v685 = vsel %vm670, -10000.0, %v661
        %v686 = vsel %vm670, -10000.0, %v662
        %687 = vmax.xlane.f32.xlu0 %v671
        %v688 = vpop.xlane.xlu0 %687
        %689 = vmax.xlane.f32.xlu0 %v672
        %v690 = vpop.xlane.xlu0 %689
        %691 = vmax.xlane.f32.xlu0 %v673
        %v692 = vpop.xlane.xlu0 %691
        %693 = vmax.xlane.f32.xlu0 %v674
        %v694 = vpop.xlane.xlu0 %693
        %695 = vmax.xlane.f32.xlu0 %v675
        %v696 = vpop.xlane.xlu0 %695
        %697 = vmax.xlane.f32.xlu0 %v676
        %v698 = vpop.xlane.xlu0 %697
        %699 = vmax.xlane.f32.xlu0 %v677
        %v700 = vpop.xlane.xlu0 %699
        %701 = vmax.xlane.f32.xlu0 %v678
        %v702 = vpop.xlane.xlu0 %701
        %703 = vmax.xlane.f32.xlu0 %v679
        %v704 = vpop.xlane.xlu0 %703
        %705 = vmax.xlane.f32.xlu0 %v680
        %v706 = vpop.xlane.xlu0 %705
        %707 = vmax.xlane.f32.xlu0 %v681
        %v708 = vpop.xlane.xlu0 %707
        %709 = vmax.xlane.f32.xlu0 %v682
        %v710 = vpop.xlane.xlu0 %709
        %711 = vmax.xlane.f32.xlu0 %v683
        %v712 = vpop.xlane.xlu0 %711
        %713 = vmax.xlane.f32.xlu0 %v684
        %v714 = vpop.xlane.xlu0 %713
        %715 = vmax.xlane.f32.xlu0 %v685
        %v716 = vpop.xlane.xlu0 %715
        %717 = vmax.xlane.f32.xlu0 %v686
        %v718 = vpop.xlane.xlu0 %717
        %v719 = vsub.f32 %v671, %v688
        %v720 = vsub.f32 %v672, %v690
        %v721 = vsub.f32 %v673, %v692
        %v722 = vsub.f32 %v674, %v694
        %v723 = vsub.f32 %v675, %v696
        %v724 = vsub.f32 %v676, %v698
        %v725 = vsub.f32 %v677, %v700
        %v726 = vsub.f32 %v678, %v702
        %v727 = vsub.f32 %v679, %v704
        %v728 = vsub.f32 %v680, %v706
        %v729 = vsub.f32 %v681, %v708
        %v730 = vsub.f32 %v682, %v710
        %v731 = vsub.f32 %v683, %v712
        %v732 = vsub.f32 %v684, %v714
        %v733 = vsub.f32 %v685, %v716
        %v734 = vsub.f32 %v686, %v718
        %v735 = vmul.f32 %v719, 1.442695
        %v736 = vpow.pop %v735
        %v737 = vmul.f32 %v720, 1.442695
        %v738 = vpow.pop %v737
        %v739 = vmul.f32 %v721, 1.442695
        %v740 = vpow.pop %v739
        %v741 = vmul.f32 %v722, 1.442695
        %v742 = vpow.pop %v741
        %v743 = vmul.f32 %v723, 1.442695
        %v744 = vpow.pop %v743
        %v745 = vmul.f32 %v724, 1.442695
        %v746 = vpow.pop %v745
        %v747 = vmul.f32 %v725, 1.442695
        %v748 = vpow.pop %v747
        %v749 = vmul.f32 %v726, 1.442695
        %v750 = vpow.pop %v749
        %v751 = vmul.f32 %v727, 1.442695
        %v752 = vpow.pop %v751
        %v753 = vmul.f32 %v728, 1.442695
        %v754 = vpow.pop %v753
        %v755 = vmul.f32 %v729, 1.442695
        %v756 = vpow.pop %v755
        %v757 = vmul.f32 %v730, 1.442695
        %v758 = vpow.pop %v757
        %v759 = vmul.f32 %v731, 1.442695
        %v760 = vpow.pop %v759
        %v761 = vmul.f32 %v732, 1.442695
        %v762 = vpow.pop %v761
        %v763 = vmul.f32 %v733, 1.442695
        %v764 = vpow.pop %v763
        %v765 = vmul.f32 %v734, 1.442695
        %v766 = vpow.pop %v765
        %767 = vadd.xlane.f32.xlu0 %v736
        %v768 = vpop.xlane.xlu0 %767
        %769 = vadd.xlane.f32.xlu0 %v738
        %v770 = vpop.xlane.xlu0 %769
        %771 = vadd.xlane.f32.xlu0 %v740
        %v772 = vpop.xlane.xlu0 %771
        %773 = vadd.xlane.f32.xlu0 %v742
        %v774 = vpop.xlane.xlu0 %773
        %775 = vadd.xlane.f32.xlu0 %v744
        %v776 = vpop.xlane.xlu0 %775
        %777 = vadd.xlane.f32.xlu0 %v746
        %v778 = vpop.xlane.xlu0 %777
        %779 = vadd.xlane.f32.xlu0 %v748
        %v780 = vpop.xlane.xlu0 %779
        %781 = vadd.xlane.f32.xlu0 %v750
        %v782 = vpop.xlane.xlu0 %781
        %783 = vadd.xlane.f32.xlu0 %v752
        %v784 = vpop.xlane.xlu0 %783
        %785 = vadd.xlane.f32.xlu0 %v754
        %v786 = vpop.xlane.xlu0 %785
        %787 = vadd.xlane.f32.xlu0 %v756
        %v788 = vpop.xlane.xlu0 %787
        %789 = vadd.xlane.f32.xlu0 %v758
        %v790 = vpop.xlane.xlu0 %789
        %791 = vadd.xlane.f32.xlu0 %v760
        %v792 = vpop.xlane.xlu0 %791
        %793 = vadd.xlane.f32.xlu0 %v762
        %v794 = vpop.xlane.xlu0 %793
        %795 = vadd.xlane.f32.xlu0 %v764
        %v796 = vpop.xlane.xlu0 %795
        %797 = vadd.xlane.f32.xlu0 %v766
        %v798 = vpop.xlane.xlu0 %797
        %v799 = vrcp.pop %v768
        %v800 = vrcp.pop %v770
        %v801 = vrcp.pop %v772
        %v802 = vrcp.pop %v774
        %v803 = vrcp.pop %v776
        %v804 = vrcp.pop %v778
        %v805 = vrcp.pop %v780
        %v806 = vrcp.pop %v782
        %v807 = vrcp.pop %v784
        %v808 = vrcp.pop %v786
        %v809 = vrcp.pop %v788
        %v810 = vrcp.pop %v790
        %v811 = vrcp.pop %v792
        %v812 = vrcp.pop %v794
        %v813 = vrcp.pop %v796
        %v814 = vrcp.pop %v798
        %v815 = vmul.f32 %v736, %v799
        %v816 = vmul.f32 %v738, %v800
        %v817 = vmul.f32 %v740, %v801
        %v818 = vmul.f32 %v742, %v802
        %v819 = vmul.f32 %v744, %v803
        %v820 = vmul.f32 %v746, %v804
        %v821 = vmul.f32 %v748, %v805
        %v822 = vmul.f32 %v750, %v806
        %v823 = vmul.f32 %v752, %v807
        %v824 = vmul.f32 %v754, %v808
        %v825 = vmul.f32 %v756, %v809
        %v826 = vmul.f32 %v758, %v810
        %v827 = vmul.f32 %v760, %v811
        %v828 = vmul.f32 %v762, %v812
        %v829 = vmul.f32 %v764, %v813
        %v830 = vmul.f32 %v766, %v814
        %v831 = vpack.c.bf16 %v816, %v815
        %v832 = vpack.c.bf16 %v818, %v817
        %v833 = vpack.c.bf16 %v820, %v819
        %v834 = vpack.c.bf16 %v822, %v821
        %v835 = vpack.c.bf16 %v824, %v823
        %v836 = vpack.c.bf16 %v826, %v825
        %v837 = vpack.c.bf16 %v828, %v827
        %v838 = vpack.c.bf16 %v830, %v829
        %v855 = vunpack.c.l.b16 %v438
        %v856 = vunpack.c.l.b16 %v439
        %v857 = vunpack.c.l.b16 %v440
        %v858 = vunpack.c.l.b16 %v441
        %v859 = vunpack.c.l.b16 %v442
        %v860 = vunpack.c.l.b16 %v443
        %v861 = vunpack.c.l.b16 %v444
        %v862 = vunpack.c.l.b16 %v445
        %v863 = vunpack.c.l.b16 %v446
        %v864 = vunpack.c.l.b16 %v447
        %v865 = vunpack.c.l.b16 %v448
        %v866 = vunpack.c.l.b16 %v449
        %v867 = vunpack.c.l.b16 %v450
        %v868 = vunpack.c.l.b16 %v451
        %v869 = vunpack.c.l.b16 %v452
        %v870 = vunpack.c.l.b16 %v453
        %v871 = vpack.c.b16 %v856, %v855
        %v872 = vpack.c.b16 %v858, %v857
        %v873 = vpack.c.b16 %v860, %v859
        %v874 = vpack.c.b16 %v862, %v861
        %v875 = vpack.c.b16 %v864, %v863
        %v876 = vpack.c.b16 %v866, %v865
        %v877 = vpack.c.b16 %v868, %v867
        %v878 = vpack.c.b16 %v870, %v869
        %887 = vmatprep.subr.bf16.mxu0 0
        %888 = vmatpush1.bf16.msra.mxu0 %v878
        %889 = vmatprep.subr.bf16.mxu0 0
        %890 = vmatpush1.bf16.msra.mxu0 %v877
        %891 = vmatprep.subr.bf16.mxu0 0
        %892 = vmatpush1.bf16.msra.mxu0 %v876
        %893 = vmatprep.subr.bf16.mxu0 0
        %894 = vmatpush1.bf16.msra.mxu0 %v875
        %895 = vmatprep.subr.bf16.mxu0 0
        %896 = vmatpush1.bf16.msra.mxu0 %v874
        %897 = vmatprep.subr.bf16.mxu0 0
        %898 = vmatpush1.bf16.msra.mxu0 %v873
        %899 = vmatprep.subr.bf16.mxu0 0
        %900 = vmatpush1.bf16.msra.mxu0 %v872
        %901 = vmatprep.subr.bf16.mxu0 0
        %902 = vmatpush1.bf16.msra.mxu0 %v871
        %903 = vmatprep.subr.bf16.mxu0 0
        %904 = vmatpush2.bf16.msra.mxu0 0
        %905 = vmatprep.subr.bf16.mxu0 0
        %906 = vmatpush2.bf16.msra.mxu0 0
        %907 = vmatprep.subr.bf16.mxu0 0
        %908 = vmatpush2.bf16.msra.mxu0 0
        %909 = vmatprep.subr.bf16.mxu0 0
        %910 = vmatpush2.bf16.msra.mxu0 0
        %911 = vmatprep.subr.bf16.mxu0 0
        %912 = vmatpush2.bf16.msra.mxu0 0
        %913 = vmatprep.subr.bf16.mxu0 0
        %914 = vmatpush2.bf16.msra.mxu0 0
        %915 = vmatprep.subr.bf16.mxu0 0
        %916 = vmatpush2.bf16.msra.mxu0 0
        %917 = vmatprep.subr.bf16.mxu0 0
        %918 = vmatpush2.bf16.msra.mxu0 0
        %919 = vmatprep.mubr.bf16.mxu0 0
        %920 = vmatmul.mubr.bf16.gmra.mxu0 %v831
        %v921 = vpop.f32.mrf.mxu0
        %v922 = vadd.f32 0.0, %v921
        %v923 = vpop.f32.mrf.mxu0
        %v924 = vpop.f32.mrf.mxu0
        %v925 = vadd.f32 0.0, %v924
        %v926 = vpop.f32.mrf.mxu0
        %927 = vmatprep.mubr.bf16.mxu0 0
        %928 = vmatmul.mubr.bf16.gmra.mxu0 %v832
        %v929 = vpop.f32.mrf.mxu0
        %v930 = vadd.f32 0.0, %v929
        %v931 = vpop.f32.mrf.mxu0
        %v932 = vpop.f32.mrf.mxu0
        %v933 = vadd.f32 0.0, %v932
        %v934 = vpop.f32.mrf.mxu0
        %935 = vmatprep.mubr.bf16.mxu0 0
        %936 = vmatmul.mubr.bf16.gmra.mxu0 %v833
        %v937 = vpop.f32.mrf.mxu0
        %v938 = vadd.f32 0.0, %v937
        %v939 = vpop.f32.mrf.mxu0
        %v940 = vpop.f32.mrf.mxu0
        %v941 = vadd.f32 0.0, %v940
        %v942 = vpop.f32.mrf.mxu0
        %943 = vmatprep.mubr.bf16.mxu0 0
        %944 = vmatmul.mubr.bf16.gmra.mxu0 %v834
        %v945 = vpop.f32.mrf.mxu0
        %v946 = vadd.f32 0.0, %v945
        %v947 = vpop.f32.mrf.mxu0
        %v948 = vpop.f32.mrf.mxu0
        %v949 = vadd.f32 0.0, %v948
        %v950 = vpop.f32.mrf.mxu0
        %951 = vmatprep.mubr.bf16.mxu0 0
        %952 = vmatmul.mubr.bf16.gmra.mxu0 %v835
        %v953 = vpop.f32.mrf.mxu0
        %v954 = vadd.f32 0.0, %v953
        %v955 = vpop.f32.mrf.mxu0
        %v956 = vpop.f32.mrf.mxu0
        %v957 = vadd.f32 0.0, %v956
        %v958 = vpop.f32.mrf.mxu0
        %959 = vmatprep.mubr.bf16.mxu0 0
        %960 = vmatmul.mubr.bf16.gmra.mxu0 %v836
        %v961 = vpop.f32.mrf.mxu0
        %v962 = vadd.f32 0.0, %v961
        %v963 = vpop.f32.mrf.mxu0
        %v964 = vpop.f32.mrf.mxu0
        %v965 = vadd.f32 0.0, %v964
        %v966 = vpop.f32.mrf.mxu0
        %967 = vmatprep.mubr.bf16.mxu0 0
        %968 = vmatmul.mubr.bf16.gmra.mxu0 %v837
        %v969 = vpop.f32.mrf.mxu0
        %v970 = vadd.f32 0.0, %v969
        %v971 = vpop.f32.mrf.mxu0
        %v972 = vpop.f32.mrf.mxu0
        %v973 = vadd.f32 0.0, %v972
        %v974 = vpop.f32.mrf.mxu0
        %975 = vmatprep.mubr.bf16.mxu0 0
        %976 = vmatmul.mubr.bf16.gmra.mxu0 %v838
        %v977 = vpop.f32.mrf.mxu0
        %v978 = vadd.f32 0.0, %v977
        %v979 = vpop.f32.mrf.mxu0
        %v980 = vpop.f32.mrf.mxu0
        %v981 = vadd.f32 0.0, %v980
        %v982 = vpop.f32.mrf.mxu0
        %983 = vdwg.mxu0
        %984 = vst [vmem:[%s367] sm:$0xff] %v922
        %985 = vst [vmem:[%s367 + $0x8] sm:$0xff] %v925
        %986 = vst [vmem:[%s367 + $0x10] sm:$0xff] %v930
        %987 = vst [vmem:[%s367 + $0x18] sm:$0xff] %v933
        %988 = vst [vmem:[%s367 + $0x20] sm:$0xff] %v938
        %989 = vst [vmem:[%s367 + $0x28] sm:$0xff] %v941
        %990 = vst [vmem:[%s367 + $0x30] sm:$0xff] %v946
        %991 = vst [vmem:[%s367 + $0x38] sm:$0xff] %v949
        %992 = vst [vmem:[%s367 + $0x40] sm:$0xff] %v954
        %993 = vst [vmem:[%s367 + $0x48] sm:$0xff] %v957
        %994 = vst [vmem:[%s367 + $0x50] sm:$0xff] %v962
        %995 = vst [vmem:[%s367 + $0x58] sm:$0xff] %v965
        %996 = vst [vmem:[%s367 + $0x60] sm:$0xff] %v970
        %997 = vst [vmem:[%s367 + $0x68] sm:$0xff] %v973
        %998 = vst [vmem:[%s367 + $0x70] sm:$0xff] %v978
        %999 = vst [vmem:[%s367 + $0x78] sm:$0xff] %v981
        %v1000 = vld [vmem:[%s401] sm:$0xff]
        %v1001 = vld [vmem:[%s401 + $0x8] sm:$0xff]
        %v1002 = vld [vmem:[%s401 + $0x10] sm:$0xff]
        %v1003 = vld [vmem:[%s401 + $0x18] sm:$0xff]
        %v1004 = vld [vmem:[%s401 + $0x20] sm:$0xff]
        %v1005 = vld [vmem:[%s401 + $0x28] sm:$0xff]
        %v1006 = vld [vmem:[%s401 + $0x30] sm:$0xff]
        %v1007 = vld [vmem:[%s401 + $0x38] sm:$0xff]
        %v1008 = vld [vmem:[%s401 + $0x40] sm:$0xff]
        %v1009 = vld [vmem:[%s401 + $0x48] sm:$0xff]
        %v1010 = vld [vmem:[%s401 + $0x50] sm:$0xff]
        %v1011 = vld [vmem:[%s401 + $0x58] sm:$0xff]
        %v1012 = vld [vmem:[%s401 + $0x60] sm:$0xff]
        %v1013 = vld [vmem:[%s401 + $0x68] sm:$0xff]
        %v1014 = vld [vmem:[%s401 + $0x70] sm:$0xff]
        %v1015 = vld [vmem:[%s401 + $0x78] sm:$0xff]
        %vm1016 = vcmp.ne.s32.totalorder %v1000, 0
        %vm1017 = vcmp.ne.s32.totalorder %v1001, 0
        %vm1018 = vcmp.ne.s32.totalorder %v1002, 0
        %vm1019 = vcmp.ne.s32.totalorder %v1003, 0
        %vm1020 = vcmp.ne.s32.totalorder %v1004, 0
        %vm1021 = vcmp.ne.s32.totalorder %v1005, 0
        %vm1022 = vcmp.ne.s32.totalorder %v1006, 0
        %vm1023 = vcmp.ne.s32.totalorder %v1007, 0
        %vm1024 = vcmp.ne.s32.totalorder %v1008, 0
        %vm1025 = vcmp.ne.s32.totalorder %v1009, 0
        %vm1026 = vcmp.ne.s32.totalorder %v1010, 0
        %vm1027 = vcmp.ne.s32.totalorder %v1011, 0
        %vm1028 = vcmp.ne.s32.totalorder %v1012, 0
        %vm1029 = vcmp.ne.s32.totalorder %v1013, 0
        %vm1030 = vcmp.ne.s32.totalorder %v1014, 0
        %vm1031 = vcmp.ne.s32.totalorder %v1015, 0
        %v1032 = vsel %vm1016, 1, 0
        %v1033 = vsel %vm1017, 1, 0
        %v1034 = vsel %vm1018, 1, 0
        %v1035 = vsel %vm1019, 1, 0
        %v1036 = vsel %vm1020, 1, 0
        %v1037 = vsel %vm1021, 1, 0
        %v1038 = vsel %vm1022, 1, 0
        %v1039 = vsel %vm1023, 1, 0
        %v1040 = vsel %vm1024, 1, 0
        %v1041 = vsel %vm1025, 1, 0
        %v1042 = vsel %vm1026, 1, 0
        %v1043 = vsel %vm1027, 1, 0
        %v1044 = vsel %vm1028, 1, 0
        %v1045 = vsel %vm1029, 1, 0
        %v1046 = vsel %vm1030, 1, 0
        %v1047 = vsel %vm1031, 1, 0
        %1048 = vset.pattern.permute.xlu0 0
        %1049 = vperm.xlu0 %1048, %v1032
        %v1050 = vpop.permute.xlu0 %1049
        %1051 = vset.pattern.permute.xlu0 0
        %1052 = vperm.xlu0 %1051, %v1033
        %v1053 = vpop.permute.xlu0 %1052
        %1054 = vset.pattern.permute.xlu0 0
        %1055 = vperm.xlu0 %1054, %v1034
        %v1056 = vpop.permute.xlu0 %1055
        %1057 = vset.pattern.permute.xlu0 0
        %1058 = vperm.xlu0 %1057, %v1035
        %v1059 = vpop.permute.xlu0 %1058
        %1060 = vset.pattern.permute.xlu0 0
        %1061 = vperm.xlu0 %1060, %v1036
        %v1062 = vpop.permute.xlu0 %1061
        %1063 = vset.pattern.permute.xlu0 0
        %1064 = vperm.xlu0 %1063, %v1037
        %v1065 = vpop.permute.xlu0 %1064
        %1066 = vset.pattern.permute.xlu0 0
        %1067 = vperm.xlu0 %1066, %v1038
        %v1068 = vpop.permute.xlu0 %1067
        %1069 = vset.pattern.permute.xlu0 0
        %1070 = vperm.xlu0 %1069, %v1039
        %v1071 = vpop.permute.xlu0 %1070
        %1072 = vset.pattern.permute.xlu0 0
        %1073 = vperm.xlu0 %1072, %v1040
        %v1074 = vpop.permute.xlu0 %1073
        %1075 = vset.pattern.permute.xlu0 0
        %1076 = vperm.xlu0 %1075, %v1041
        %v1077 = vpop.permute.xlu0 %1076
        %1078 = vset.pattern.permute.xlu0 0
        %1079 = vperm.xlu0 %1078, %v1042
        %v1080 = vpop.permute.xlu0 %1079
        %1081 = vset.pattern.permute.xlu0 0
        %1082 = vperm.xlu0 %1081, %v1043
        %v1083 = vpop.permute.xlu0 %1082
        %1084 = vset.pattern.permute.xlu0 0
        %1085 = vperm.xlu0 %1084, %v1044
        %v1086 = vpop.permute.xlu0 %1085
        %1087 = vset.pattern.permute.xlu0 0
        %1088 = vperm.xlu0 %1087, %v1045
        %v1089 = vpop.permute.xlu0 %1088
        %1090 = vset.pattern.permute.xlu0 0
        %1091 = vperm.xlu0 %1090, %v1046
        %v1092 = vpop.permute.xlu0 %1091
        %1093 = vset.pattern.permute.xlu0 0
        %1094 = vperm.xlu0 %1093, %v1047
        %v1095 = vpop.permute.xlu0 %1094
        %vm1096 = vcmp.eq.s32.totalorder %v1050, 1
        %vm1097 = vcmp.eq.s32.totalorder %v1053, 1
        %vm1098 = vcmp.eq.s32.totalorder %v1056, 1
        %vm1099 = vcmp.eq.s32.totalorder %v1059, 1
        %vm1100 = vcmp.eq.s32.totalorder %v1062, 1
        %vm1101 = vcmp.eq.s32.totalorder %v1065, 1
        %vm1102 = vcmp.eq.s32.totalorder %v1068, 1
        %vm1103 = vcmp.eq.s32.totalorder %v1071, 1
        %vm1104 = vcmp.eq.s32.totalorder %v1074, 1
        %vm1105 = vcmp.eq.s32.totalorder %v1077, 1
        %vm1106 = vcmp.eq.s32.totalorder %v1080, 1
        %vm1107 = vcmp.eq.s32.totalorder %v1083, 1
        %vm1108 = vcmp.eq.s32.totalorder %v1086, 1
        %vm1109 = vcmp.eq.s32.totalorder %v1089, 1
        %vm1110 = vcmp.eq.s32.totalorder %v1092, 1
        %vm1111 = vcmp.eq.s32.totalorder %v1095, 1
        %v1112 = vsel %vm1096, 0.0, %v815
        %v1113 = vsel %vm1097, 0.0, %v816
        %v1114 = vsel %vm1098, 0.0, %v817
        %v1115 = vsel %vm1099, 0.0, %v818
        %v1116 = vsel %vm1100, 0.0, %v819
        %v1117 = vsel %vm1101, 0.0, %v820
        %v1118 = vsel %vm1102, 0.0, %v821
        %v1119 = vsel %vm1103, 0.0, %v822
        %v1120 = vsel %vm1104, 0.0, %v823
        %v1121 = vsel %vm1105, 0.0, %v824
        %v1122 = vsel %vm1106, 0.0, %v825
        %v1123 = vsel %vm1107, 0.0, %v826
        %v1124 = vsel %vm1108, 0.0, %v827
        %v1125 = vsel %vm1109, 0.0, %v828
        %v1126 = vsel %vm1110, 0.0, %v829
        %v1127 = vsel %vm1111, 0.0, %v830
        %v1128 = vpack.c.bf16 %v1113, %v1112
        %v1129 = vpack.c.bf16 %v1115, %v1114
        %v1130 = vpack.c.bf16 %v1117, %v1116
        %v1131 = vpack.c.bf16 %v1119, %v1118
        %v1132 = vpack.c.bf16 %v1121, %v1120
        %v1133 = vpack.c.bf16 %v1123, %v1122
        %v1134 = vpack.c.bf16 %v1125, %v1124
        %v1135 = vpack.c.bf16 %v1127, %v1126
        %v1144 = vunpack.c.l.b16 %v1128
        %v1145 = vunpack.c.h.b16 %v1128
        %v1146 = vunpack.c.l.b16 %v1129
        %v1147 = vunpack.c.h.b16 %v1129
        %v1148 = vunpack.c.l.b16 %v1130
        %v1149 = vunpack.c.h.b16 %v1130
        %v1150 = vunpack.c.l.b16 %v1131
        %v1151 = vunpack.c.h.b16 %v1131
        %v1152 = vunpack.c.l.b16 %v1132
        %v1153 = vunpack.c.h.b16 %v1132
        %v1154 = vunpack.c.l.b16 %v1133
        %v1155 = vunpack.c.h.b16 %v1133
        %v1156 = vunpack.c.l.b16 %v1134
        %v1157 = vunpack.c.h.b16 %v1134
        %v1158 = vunpack.c.l.b16 %v1135
        %v1159 = vunpack.c.h.b16 %v1135
        %v1160 = vpack.c.b16 %v1144, %v1144
        %v1161 = vpack.c.b16 %v1145, %v1145
        %v1162 = vpack.c.b16 %v1146, %v1146
        %v1163 = vpack.c.b16 %v1147, %v1147
        %v1164 = vpack.c.b16 %v1148, %v1148
        %v1165 = vpack.c.b16 %v1149, %v1149
        %v1166 = vpack.c.b16 %v1150, %v1150
        %v1167 = vpack.c.b16 %v1151, %v1151
        %v1168 = vpack.c.b16 %v1152, %v1152
        %v1169 = vpack.c.b16 %v1153, %v1153
        %v1170 = vpack.c.b16 %v1154, %v1154
        %v1171 = vpack.c.b16 %v1155, %v1155
        %v1172 = vpack.c.b16 %v1156, %v1156
        %v1173 = vpack.c.b16 %v1157, %v1157
        %v1174 = vpack.c.b16 %v1158, %v1158
        %v1175 = vpack.c.b16 %v1159, %v1159
        %1192 = vst [vmem:[%s374] sm:$0xf] %v1160
        %1193 = vst [vmem:[%s374 + $0x4] sm:$0xf] %v1161
        %1194 = vst [vmem:[%s374 + $0x8] sm:$0xf] %v1162
        %1195 = vst [vmem:[%s374 + $0xc] sm:$0xf] %v1163
        %1196 = vst [vmem:[%s374 + $0x10] sm:$0xf] %v1164
        %1197 = vst [vmem:[%s374 + $0x14] sm:$0xf] %v1165
        %1198 = vst [vmem:[%s374 + $0x18] sm:$0xf] %v1166
        %1199 = vst [vmem:[%s374 + $0x1c] sm:$0xf] %v1167
        %1200 = vst [vmem:[%s374 + $0x20] sm:$0xf] %v1168
        %1201 = vst [vmem:[%s374 + $0x24] sm:$0xf] %v1169
        %1202 = vst [vmem:[%s374 + $0x28] sm:$0xf] %v1170
        %1203 = vst [vmem:[%s374 + $0x2c] sm:$0xf] %v1171
        %1204 = vst [vmem:[%s374 + $0x30] sm:$0xf] %v1172
        %1205 = vst [vmem:[%s374 + $0x34] sm:$0xf] %v1173
        %1206 = vst [vmem:[%s374 + $0x38] sm:$0xf] %v1174
        %1207 = vst [vmem:[%s374 + $0x3c] sm:$0xf] %v1175
        %s1208 = sand.u32 %s183, 1
        %s1209 = scalar_lea.sflag [#allocation4], %s1208
        %s1210 = sand.u32 %s183, 1
        %s1211 = smul.addr %s1210, 128
        %s1212 = scalar_lea.vmem [#allocation5], %s1211
        %s1213 = sand.u32 %s211, 1
        %s1214 = scalar_lea.sflag [#allocation7], %s1213
        %s1215 = sand.u32 %s211, 1
        %s1216 = smul.addr %s1215, 64
        %s1217 = scalar_lea.vmem [#allocation6], %s1216
        // Predicated region
        $region45: #{tpu_custom_call.1} parent=39 // pred_check
          %p1218 = pneg %p193
        $region46: #{tpu_custom_call.1} parent=39 // pred_check_branch
          %1220 = sbr.rel (%p1218) target = $region48
        $region47: #{tpu_custom_call.1} parent=39 // pred_region
          %s1221 = smul.u32 16, %s32
          %s1223 = ssub.s32 2048, 2048
          %1224 = vsyncadd %s1209, %s1223
          %s1225 = smul.addr %s31, 16
          %s1226 = sadd.s32 %s1221, %s1225
          %s1227 = smul.addr %s1226, 128
          %s1228 = scalar_lea.hbm %s5, %s1227
          %s1229 = sshll.u32 %s1212, 4
          %s1230 = int_to_ptr.vmem [resolvable:$true] %s1229
          %1235 = dma.vmem_to_hbm [thread:$0]  %s1230, 2048, %s1228, %s1209, 128, 128, 8
        $region48: #{tpu_custom_call.1} parent=39 // pred_fallthru
          _
        // Predicated region
        $region49: #{tpu_custom_call.1} parent=39 // pred_check
          %p1236 = pneg %p221
        $region50: #{tpu_custom_call.1} parent=39 // pred_check_branch
          %1238 = sbr.rel (%p1236) target = $region52
        $region51: #{tpu_custom_call.1} parent=39 // pred_region
          %s1239 = smul.u32 16, %s32
          %s1241 = ssub.s32 1024, 1024
          %1242 = vsyncadd %s1214, %s1241
          %s1243 = smul.addr %s31, 16
          %s1244 = sadd.s32 %s1239, %s1243
          %s1245 = smul.addr %s1244, 64
          %s1246 = scalar_lea.hbm %s6, %s1245
          %s1247 = sshll.u32 %s1217, 4
          %s1248 = int_to_ptr.vmem [resolvable:$true] %s1247
          %1253 = dma.vmem_to_hbm [thread:$0]  %s1248, 1024, %s1246, %s1214, 64, 64, 4
        $region52: #{tpu_custom_call.1} parent=39 // pred_fallthru
          _
      $region40: #{tpu_custom_call.1} parent=5 // pred_fallthru
        _
      %p1254 = scmp.le.s32.totalorder 2, %s22
      // Predicated region
      $region53: #{tpu_custom_call.1} parent=5 // pred_check
        %p1255 = pneg %p1254
      $region54: #{tpu_custom_call.1} parent=5 // pred_check_branch
        %1257 = sbr.rel (%p1255) target = $region56
      $region55: #{tpu_custom_call.1} parent=5 // pred_region
        %s1258 = ssub.s32 %s22, 2
        // Predicated region
        $region57: #{tpu_custom_call.1} parent=55 // pred_check
          %p1259 = pneg %p199
        $region58: #{tpu_custom_call.1} parent=55 // pred_check_branch
          %1261 = sbr.rel (%p1259) target = $region60
        $region59: #{tpu_custom_call.1} parent=55 // pred_region
          %s1262 = sand.u32 %s184, 1
          %s1263 = scalar_lea.sflag [#allocation4], %s1262
          %s1264 = sand.u32 %s184, 1
          %s1265 = smul.addr %s1264, 128
          %s1266 = scalar_lea.vmem [#allocation5], %s1265
          %1267 = dma.done %s1263, 2048
        $region60: #{tpu_custom_call.1} parent=55 // pred_fallthru
          _
        // Predicated region
        $region61: #{tpu_custom_call.1} parent=55 // pred_check
          %p1268 = pneg %p227
        $region62: #{tpu_custom_call.1} parent=55 // pred_check_branch
          %1270 = sbr.rel (%p1268) target = $region64
        $region63: #{tpu_custom_call.1} parent=55 // pred_region
          %s1271 = sand.u32 %s212, 1
          %s1272 = scalar_lea.sflag [#allocation7], %s1271
          %s1273 = sand.u32 %s212, 1
          %s1274 = smul.addr %s1273, 64
          %s1275 = scalar_lea.vmem [#allocation6], %s1274
          %1276 = dma.done %s1272, 1024
        $region64: #{tpu_custom_call.1} parent=55 // pred_fallthru
          _
      $region56: #{tpu_custom_call.1} parent=5 // pred_fallthru
        _
    $region6: #{tpu_custom_call.1} parent=1 // loop_footer
      %s26 = sadd.s32 1, %s22
    $region7: #{tpu_custom_call.1} parent=1 // loop_footer_branch
      %21 = sbr.rel target = $region3
    $region8: #{tpu_custom_call.1} parent=1 // loop_exit
      _
    %1277 = vsyncpa [#allocation3], 1
    %s1278 = scalar_lea.sflag [#allocation3], 1
    %1279 = vsyncpa %s1278, 1
    %1280 = vsyncpa [#allocation4], 1
    %s1281 = scalar_lea.sflag [#allocation4], 1
    %1282 = vsyncpa %s1281, 1
    %1283 = vsyncpa [#allocation7], 1
    %s1284 = scalar_lea.sflag [#allocation7], 1
    %1285 = vsyncpa %s1284, 1

</llo_original>
